<compile_context>
chip_gen: v6e
topology: v6e:2x2x1
jax: 0.10.0
libtpu: 0.0.40
codegen_flags: <defaults>
</compile_context>

<pallas_src>
import math

import numpy as np
import jax
import jax.numpy as jnp
from jax.experimental import pallas as pl
from jax.experimental.pallas import tpu as pltpu


# ----------------------------------------------------------------------------
# PyTorch-exact bilinear (align_corners=False) interpolation matrix.
# out = M @ in along one spatial axis;  M has <=2 non-zeros per row.
# ----------------------------------------------------------------------------
def interp_matrix(out_size: int, in_size: int) -> jnp.ndarray:
    if out_size == in_size:
        return jnp.eye(out_size, dtype=jnp.float32)
    scale = in_size / out_size
    dst = np.arange(out_size, dtype=np.float64)
    src = (dst + 0.5) * scale - 0.5
    src = np.clip(src, 0.0, None)                     # PyTorch clamps to 0
    i0 = np.minimum(np.floor(src).astype(np.int64), in_size - 1)
    i1 = np.minimum(i0 + 1, in_size - 1)
    w1 = src - i0
    w0 = 1.0 - w1
    m = np.zeros((out_size, in_size), dtype=np.float32)
    m[np.arange(out_size), i0] += w0
    m[np.arange(out_size), i1] += w1
    return jnp.asarray(m)


def resize_depth(depth_nchw, Hi: int, Wi: int) -> jnp.ndarray:
    """Exact PyTorch bilinear (align_corners=False) resize to (Hi, Wi), fp32."""
    _, _, H, W = depth_nchw.shape
    rh = interp_matrix(Hi, H)                          # (Hi, H)
    rw = interp_matrix(Wi, W)                          # (Wi, W)
    return jnp.einsum('oh,bdhw,pw->bdop', rh, depth_nchw.astype(jnp.float32), rw)


def _vmem_capacity_bytes():
    try:
        return int(pltpu.get_tpu_info().vmem_capacity_bytes)
    except Exception:
        return None


def choose_row_tile(Hi: int, Wi: int, C: int, itemsize: int,
                    target_bytes: int, min_tiles: int) -> int:
    """Pick a row tile TH with Hi % TH == 0 and (TH == Hi or TH*Wi % 128 == 0).

    Preference: largest TH whose color block fits `target_bytes` AND yields at
    least `min_tiles` row tiles (pipeline depth / 2nd TensorCore on v7x);
    then the smallest fitting TH (maximise steps); then the smallest legal TH
    (vmem_limit is sized from the actual block so nothing blows up silently)."""
    legal = [th for th in range(1, Hi + 1)
             if Hi % th == 0 and (th == Hi or (th * Wi) % 128 == 0)]
    legal.sort(reverse=True)                           # largest first
    fits = lambda th: th * Wi * C * itemsize <= target_bytes
    both = [th for th in legal if fits(th) and Hi // th >= min_tiles]
    if both:
        return both[0]
    only_fit = [th for th in legal if fits(th)]
    if only_fit:
        return only_fit[-1]
    return legal[-1]


# ----------------------------------------------------------------------------
# Pallas kernel: one grid step == one row tile of one batch element.
#   color_ref : (1, C, T_hw)   color tile, storage dtype, lane axis = flat spatial
#   depth_ref : (1, D, T_hw)   pre-resized depth-gradient tile (fp32)
#   wc_ref    : (C, C)         1x1-conv weight, color part (storage dtype)
#   wd_ref    : (C, D)         1x1-conv weight, depth part (fp32)
#   b_ref     : (C, 1)         bias (fp32)
#   out_ref   : (1, C, T_hw)
# ----------------------------------------------------------------------------
def fusion_kernel(color_ref, depth_ref, wc_ref, wd_ref, b_ref, out_ref):
    # 1x1 conv: two lane-dense MXU matmuls (no channel concat materialized),
    # fp32 accumulation, ReLU, single unmasked store.
    acc = jnp.dot(wc_ref[...], color_ref[0], preferred_element_type=jnp.float32)
    acc = acc + jnp.dot(wd_ref[...], depth_ref[0], preferred_element_type=jnp.float32)
    acc = acc + b_ref[...]                             # (C,1) broadcast over lanes
    out_ref[0] = jnp.maximum(acc, 0.0).astype(out_ref.dtype)


# ----------------------------------------------------------------------------
# Per-scale wrappers.
# ----------------------------------------------------------------------------
def fuse_one_scale_pallas(color_nchw, depth_resized, weight, bias, *,
                          min_grid_steps=8):
    """color_nchw: (B, C, Hi, Wi); depth_resized: (B, D, Hi, Wi) fp32;
       weight: (C, C+D, 1, 1); bias: (C,).  Returns (B, C, Hi, Wi)."""
    B, C, Hi, Wi = color_nchw.shape
    D = depth_resized.shape[1]
    HW = Hi * Wi

    # Contiguous (free) reshapes: flattened spatial on the lane axis.
    color_flat = color_nchw.reshape(B, C, HW)
    depth_flat = depth_resized.astype(jnp.float32).reshape(B, D, HW)

    w2d = weight[:, :, 0, 0]                           # (C_out, C_in + D)
    wc = w2d[:, :C].astype(color_nchw.dtype)           # tiny one-time wrapper cast
    wd = w2d[:, C:].astype(jnp.float32)
    b2 = bias.astype(jnp.float32).reshape(C, 1)

    itemsize = jnp.dtype(color_nchw.dtype).itemsize    # actual DMA'd dtype
    vmem_cap = _vmem_capacity_bytes()
    if vmem_cap is not None and vmem_cap >= (96 << 20):
        target_block_bytes = 12 << 20                  # v5e / v6e: 128 MiB VMEM
    else:
        target_block_bytes = 4 << 20                   # v7x (64 MiB) or unknown

    min_tiles = max(1, math.ceil(min_grid_steps / B))
    TH = choose_row_tile(Hi, Wi, C, itemsize, target_block_bytes, min_tiles)
    n_row_tiles = Hi // TH
    T_hw = TH * Wi

    # VMEM request from the actual double-buffered blocks (+ constants, + headroom).
    block_bytes = T_hw * (2 * C * itemsize + D * 4)    # color in + out + depth in
    const_bytes = C * C * itemsize + C * D * 4 + C * 4
    needed = 2 * (block_bytes + const_bytes)
    vmem_limit = max(int(1.5 * needed) + (8 << 20), 16 << 20)
    if vmem_cap is not None:
        vmem_limit = min(vmem_limit, vmem_cap - (8 << 20))

    out_flat = pl.pallas_call(
        fusion_kernel,
        out_shape=jax.ShapeDtypeStruct((B, C, HW), color_nchw.dtype),
        grid=(B, n_row_tiles),
        in_specs=[
            pl.BlockSpec((1, C, T_hw), lambda b, i: (b, 0, i)),
            pl.BlockSpec((1, D, T_hw), lambda b, i: (b, 0, i)),
            pl.BlockSpec((C, C), lambda b, i: (0, 0)),
            pl.BlockSpec((C, D), lambda b, i: (0, 0)),
            pl.BlockSpec((C, 1), lambda b, i: (0, 0)),
        ],
        out_specs=pl.BlockSpec((1, C, T_hw), lambda b, i: (b, 0, i)),
        compiler_params=pltpu.CompilerParams(
            dimension_semantics=("parallel", "parallel"),
            vmem_limit_bytes=int(vmem_limit),
        ),
    )(color_flat, depth_flat, wc, wd, b2)

    return out_flat.reshape(B, C, Hi, Wi)


def fuse_one_scale_xla(color_nchw, depth_resized, weight, bias):
    """Fused XLA path for tiny scales (Hi*Wi < ~512): masked stores + per-call
    overhead would dominate a Pallas kernel there."""
    C = color_nchw.shape[1]
    w2d = weight[:, :, 0, 0].astype(jnp.float32)
    y = (jnp.einsum('oc,bchw->bohw', w2d[:, :C], color_nchw.astype(jnp.float32))
         + jnp.einsum('od,bdhw->bohw', w2d[:, C:], depth_resized.astype(jnp.float32))
         + bias.astype(jnp.float32)[None, :, None, None])
    return jnp.maximum(y, 0.0).astype(color_nchw.dtype)


def depth_gradient_injection(color_feature_maps, depth_gradient_map, params, *,
                             min_pallas_hw=512, min_grid_steps=8):
    """Forward of DepthGradientInjection. params = list of (weight, bias)."""
    if depth_gradient_map is None:
        return list(color_feature_maps)
    fused = []
    for color_feat, (w, b) in zip(color_feature_maps, params):
        _, _, Hi, Wi = color_feat.shape
        ds = resize_depth(depth_gradient_map, Hi, Wi)   # exact PyTorch bilinear, fp32
        if Hi * Wi >= min_pallas_hw:
            fused.append(fuse_one_scale_pallas(color_feat, ds, w, b,
                                               min_grid_steps=min_grid_steps))
        else:
            fused.append(fuse_one_scale_xla(color_feat, ds, w, b))
    return fused


# ----------------------------------------------------------------------------
# Pure-JAX reference (same bilinear semantics) for sanity checks.
# ----------------------------------------------------------------------------
def reference_scale(color_nchw, depth_nchw, weight, bias):
    B, C, Hi, Wi = color_nchw.shape
    ds = resize_depth(depth_nchw, Hi, Wi)
    merged = jnp.concatenate([color_nchw.astype(jnp.float32), ds], axis=1)
    w2d = weight[:, :, 0, 0]                            # (C, C+D)
    y = jnp.einsum('oc,bchw->bohw', w2d, merged) + bias[None, :, None, None]
    return jnp.maximum(y, 0.0)


if __name__ == "__main__":
    key = jax.random.PRNGKey(0)

    # Module config (small): two scales; depth map at "image" resolution.
    color_channels = [8, 16]
    depth_gradient_channels = 2
    B, H, W = 2, 64, 64
    spatial = [(32, 32), (16, 16)]     # scale 0 -> Pallas path, scale 1 -> XLA fallback

    keys = jax.random.split(key, 8)
    color_maps = []
    for s, (c, (hi, wi)) in enumerate(zip(color_channels, spatial)):
        color_maps.append(
            jax.random.normal(keys[s], (B, c, hi, wi), dtype=jnp.float32))
    depth_map = jax.random.normal(
        keys[2], (B, depth_gradient_channels, H, W), dtype=jnp.float32)

    # Deterministic parameters: Conv2d(C+D, C, 1) weight (C, C+D, 1, 1), bias (C,).
    params = []
    for s, c in enumerate(color_channels):
        wkey, bkey = jax.random.split(keys[4 + s])
        fan_in = c + depth_gradient_channels
        bound = 1.0 / np.sqrt(fan_in)
        wgt = jax.random.uniform(wkey, (c, fan_in, 1, 1), jnp.float32, -bound, bound)
        bia = jax.random.uniform(bkey, (c,), jnp.float32, -bound, bound)
        params.append((wgt, bia))

    # ---- fp32 storage path (exact PyTorch semantics) ------------------------
    fused = depth_gradient_injection(color_maps, depth_map, params)
    fused = [jax.block_until_ready(f) for f in fused]
    for i, f in enumerate(fused):
        ref = reference_scale(color_maps[i], depth_map, *params[i])
        assert f.shape == color_maps[i].shape and f.dtype == color_maps[i].dtype
        np.testing.assert_allclose(np.asarray(f), np.asarray(ref),
                                   rtol=1e-5, atol=1e-5)

    # ---- bf16 storage path (halves color read + output write HBM bytes) -----
    color_bf16 = [c.astype(jnp.bfloat16) for c in color_maps]
    fused_bf16 = depth_gradient_injection(color_bf16, depth_map, params)
    fused_bf16 = [jax.block_until_ready(f) for f in fused_bf16]
    for i, f in enumerate(fused_bf16):
        ref = np.asarray(reference_scale(color_bf16[i].astype(jnp.float32),
                                         depth_map, *params[i]))
        assert f.shape == color_maps[i].shape and f.dtype == jnp.bfloat16
        got = np.asarray(f.astype(jnp.float32))
        max_err = float(np.max(np.abs(got - ref)))
        assert max_err < 0.1, f"bf16 path drifted too far: {max_err}"

    print("KERNEL_OK")
</pallas_src>

<mosaic_0001>
module attributes {stable_mosaic.version = 11 : i64} {
  func.func @fusion_kernel(%arg0: i32, %arg1: i32, %arg2: memref<1x8x256xf32, #tpu.memory_space<vmem>>, %arg3: memref<1x2x256xf32, #tpu.memory_space<vmem>>, %arg4: memref<8x8xf32, #tpu.memory_space<vmem>>, %arg5: memref<8x2xf32, #tpu.memory_space<vmem>>, %arg6: memref<8x1xf32, #tpu.memory_space<vmem>>, %arg7: memref<1x8x256xf32, #tpu.memory_space<vmem>>) attributes {dimension_semantics = [#tpu.dimension_semantics<parallel>, #tpu.dimension_semantics<parallel>], iteration_bounds = array<i64: 2, 4>, scalar_prefetch = 0 : i64, scratch_operands = 0 : i64, tpu.core_type = #tpu.core_type<tc>, window_params = [{transform_indices = @transform_0, window_bounds = array<i64: 1, 8, 256>}, {transform_indices = @transform_1, window_bounds = array<i64: 1, 2, 256>}, {pipeline_mode = #tpu.pipeline_mode<synchronous>, transform_indices = @transform_2, window_bounds = array<i64: 8, 8>}, {pipeline_mode = #tpu.pipeline_mode<synchronous>, transform_indices = @transform_3, window_bounds = array<i64: 8, 2>}, {pipeline_mode = #tpu.pipeline_mode<synchronous>, transform_indices = @transform_4, window_bounds = array<i64: 8, 1>}, {transform_indices = @transform_5, window_bounds = array<i64: 1, 8, 256>}]} {
    %c0 = arith.constant 0 : index
    %c0_0 = arith.constant 0 : index
    %0 = vector.load %arg4[%c0, %c0_0] : memref<8x8xf32, #tpu.memory_space<vmem>>, vector<8x8xf32>
    %c0_1 = arith.constant 0 : index
    %c0_2 = arith.constant 0 : index
    %c0_3 = arith.constant 0 : index
    %1 = vector.load %arg2[%c0_1, %c0_2, %c0_3] : memref<1x8x256xf32, #tpu.memory_space<vmem>>, vector<1x8x256xf32>
    %2 = vector.shape_cast %1 : vector<1x8x256xf32> to vector<8x256xf32>
    %cst = arith.constant dense<0.000000e+00> : vector<8x256xf32>
    %3 = tpu.matmul %0, %2, %cst {dimension_numbers = #tpu.dot_dimension_numbers<[1], [0], [0], [1], [0, 0, 1, 1], [], []>} : vector<8x8xf32>, vector<8x256xf32>, vector<8x256xf32> -> vector<8x256xf32>
    %c0_4 = arith.constant 0 : index
    %c0_5 = arith.constant 0 : index
    %4 = vector.load %arg5[%c0_4, %c0_5] : memref<8x2xf32, #tpu.memory_space<vmem>>, vector<8x2xf32>
    %c0_6 = arith.constant 0 : index
    %c0_7 = arith.constant 0 : index
    %c0_8 = arith.constant 0 : index
    %5 = vector.load %arg3[%c0_6, %c0_7, %c0_8] : memref<1x2x256xf32, #tpu.memory_space<vmem>>, vector<1x2x256xf32>
    %6 = vector.shape_cast %5 : vector<1x2x256xf32> to vector<2x256xf32>
    %cst_9 = arith.constant dense<0.000000e+00> : vector<8x256xf32>
    %7 = tpu.matmul %4, %6, %cst_9 {dimension_numbers = #tpu.dot_dimension_numbers<[1], [0], [0], [1], [0, 0, 1, 1], [], []>} : vector<8x2xf32>, vector<2x256xf32>, vector<8x256xf32> -> vector<8x256xf32>
    %8 = arith.addf %3, %7 : vector<8x256xf32>
    %c0_10 = arith.constant 0 : index
    %c0_11 = arith.constant 0 : index
    %9 = vector.load %arg6[%c0_10, %c0_11] : memref<8x1xf32, #tpu.memory_space<vmem>>, vector<8x1xf32>
    %10 = vector.broadcast %9 : vector<8x1xf32> to vector<8x256xf32>
    %11 = arith.addf %8, %10 : vector<8x256xf32>
    %cst_12 = arith.constant 0.000000e+00 : f32
    %12 = vector.broadcast %cst_12 : f32 to vector<8x256xf32>
    %13 = arith.maximumf %11, %12 : vector<8x256xf32>
    %c0_13 = arith.constant 0 : index
    %c0_14 = arith.constant 0 : index
    %c0_15 = arith.constant 0 : index
    %14 = vector.load %arg7[%c0_13, %c0_14, %c0_15] : memref<1x8x256xf32, #tpu.memory_space<vmem>>, vector<1x8x256xf32>
    %15 = vector.shape_cast %14 : vector<1x8x256xf32> to vector<8x256xf32>
    %16 = vector.shape_cast %13 : vector<8x256xf32> to vector<1x8x256xf32>
    tpu.vector_store %arg7[%c0_13, %c0_14, %c0_15], %16 {strides = array<i32>} : memref<1x8x256xf32, #tpu.memory_space<vmem>>, vector<1x8x256xf32>,
    return
  }
  func.func @transform_0(%arg0: i32, %arg1: i32) -> (i32, i32, i32) {
    %c0_i32 = arith.constant 0 : i32
    %c0_i32_0 = arith.constant 0 : i32
    return %arg0, %c0_i32, %arg1 : i32, i32, i32
  }
  func.func @transform_1(%arg0: i32, %arg1: i32) -> (i32, i32, i32) {
    %c0_i32 = arith.constant 0 : i32
    %c0_i32_0 = arith.constant 0 : i32
    return %arg0, %c0_i32, %arg1 : i32, i32, i32
  }
  func.func @transform_2(%arg0: i32, %arg1: i32) -> (i32, i32) {
    %c0_i32 = arith.constant 0 : i32
    %c0_i32_0 = arith.constant 0 : i32
    %c0_i32_1 = arith.constant 0 : i32
    return %c0_i32, %c0_i32_0 : i32, i32
  }
  func.func @transform_3(%arg0: i32, %arg1: i32) -> (i32, i32) {
    %c0_i32 = arith.constant 0 : i32
    %c0_i32_0 = arith.constant 0 : i32
    %c0_i32_1 = arith.constant 0 : i32
    return %c0_i32, %c0_i32_0 : i32, i32
  }
  func.func @transform_4(%arg0: i32, %arg1: i32) -> (i32, i32) {
    %c0_i32 = arith.constant 0 : i32
    %c0_i32_0 = arith.constant 0 : i32
    %c0_i32_1 = arith.constant 0 : i32
    return %c0_i32, %c0_i32_0 : i32, i32
  }
  func.func @transform_5(%arg0: i32, %arg1: i32) -> (i32, i32, i32) {
    %c0_i32 = arith.constant 0 : i32
    %c0_i32_0 = arith.constant 0 : i32
    return %arg0, %c0_i32, %arg1 : i32, i32, i32
  }
}

</mosaic_0001>

<llo_original>
// kernel: tpu_custom_call.1
$region0: #{tpu_custom_call.1}
  #allocation0 [shape = 'u32[]', space=smem, size = 0x4, offset = 0x4, fixed_abs, tag = 'smem constant byte address 0x4 - core index']
  #allocation1 [shape = 'u32[144,128]{1,0:T(1,128)}', space=vmem, size = 0x12000, scoped, tag = 'internal scratch']
  %s0 = inlined_call_operand.hbm [shape: f32[2,8,1024], index: 0, kind: input, shape index: {}]
  %s1 = inlined_call_operand.hbm [shape: f32[2,2,1024], index: 1, kind: input, shape index: {}]
  %s2 = inlined_call_operand.vmem [shape: f32[8,8], index: 2, kind: input, shape index: {}]
  %s3 = inlined_call_operand.vmem [shape: f32[8,2], index: 3, kind: input, shape index: {}]
  %s4 = inlined_call_operand.vmem [shape: f32[8,1], index: 4, kind: input, shape index: {}]
  %s5 = inlined_call_operand.hbm [shape: f32[2,8,1024], index: 5, kind: output, shape index: {}]
  %s6 = sld [smem:[#allocation0]]
  $region61: #{tpu_custom_call.1} parent=0
    _
  %s8 = ssub.s32 1, %s6
  %s9 = scalar_select 0, %s8, %s6
  $region1: #{tpu_custom_call.1} parent=0
    #allocation2 [shape = 'u8[16384]{0}', space=vmem, size = 0x4000, scoped, tag = 'input window, operand 0']
    #allocation3 [shape = 's32[2]{0}', space=sflag, size = 0x8, scoped, tag = 'scoped memory for tpu_custom_call.1']
    #allocation4 [shape = 's32[2]{0}', space=sflag, size = 0x8, scoped, tag = 'scoped memory for tpu_custom_call.1']
    #allocation5 [shape = 'u8[4096]{0}', space=vmem, size = 0x1000, scoped, tag = 'input window, operand 1']
    #allocation6 [shape = 's32[2]{0}', space=sflag, size = 0x8, scoped, tag = 'scoped memory for tpu_custom_call.1']
    #allocation7 [shape = 'u8[16384]{0}', space=vmem, size = 0x4000, scoped, tag = 'output window, operand 0']
    %10 = vsyncpa [#allocation3], 0
    %s11 = scalar_lea.sflag [#allocation3], 1
    %12 = vsyncpa %s11, 0
    %13 = vsyncpa [#allocation6], 0
    %s14 = scalar_lea.sflag [#allocation6], 1
    %15 = vsyncpa %s14, 0
    %16 = vsyncpa [#allocation4], 0
    %s17 = scalar_lea.sflag [#allocation4], 1
    %18 = vsyncpa %s17, 0
    loop: start=0, step=1, limit=10
    $region2: #{tpu_custom_call.1} parent=1 // loop_pre_header
      _
    $region3: #{tpu_custom_call.1} parent=1 // loop_header
      %s20 = sphi 0, %s24
      %p21 = scmp.ge.s32.totalorder %s20, 10
      %s27 = sphi 0, %s39
      %s28 = sphi 0, %s35
      %s29 = sphi 0, %s27
      %s30 = sphi 0, %s28
      %s31 = sphi 0, %s29
      %s32 = sphi 0, %s30
      %s44 = sphi 0, %s46
      %s47 = sphi 0, %s44
      %s48 = sphi 0, %s47
      %s64 = sphi 0, %s48
      %s72 = sphi 0, %s74
      %s75 = sphi 0, %s72
      %s76 = sphi 0, %s75
      %s92 = sphi 0, %s76
      %s96 = sphi 0, %s96
      %s98 = sphi 0, %s96
      %s99 = sphi 0, %s98
      %s113 = sphi 0, %s99
      %s117 = sphi 0, %s117
      %s119 = sphi 0, %s117
      %s120 = sphi 0, %s119
      %s134 = sphi 0, %s120
      %s138 = sphi 0, %s138
      %s140 = sphi 0, %s138
      %s141 = sphi 0, %s140
      %s155 = sphi 0, %s141
      %s163 = sphi 0, %s165
      %s166 = sphi 0, %s163
      %s167 = sphi 0, %s166
      %s183 = sphi 0, %s167
    $region4: #{tpu_custom_call.1} parent=1 // loop_header_branch
      %23 = sbr.rel (%p21) target = $region8
    $region5: #{tpu_custom_call.1} parent=1 // loop_body
      %s25 = ssub.s32 %s20, 1
      %s26 = ssub.s32 %s20, 2
      %s33 = sadd.s32 1, %s28
      %p34 = scmp.ge.s32.totalorder %s33, 4
      %s35 = scalar_select %p34, 0, %s33
      %s36 = sadd.s32 1, %s27
      %s37 = scalar_select %p34, %s36, %s27
      %p38 = scmp.ge.s32.totalorder %s37, 2
      %s39 = scalar_select %p38, 0, %s37
      %s40 = ssub.s32 %s27, %s39
      %s41 = ssub.s32 %s28, %s35
      %s42 = sor.u32 %s40, %s41
      %p43 = scmp.eq.s32.totalorder %s42, 0
      %s45 = sadd.s32 %s44, 1
      %s46 = scalar_select %p43, %s44, %s45
      %p49 = pneg %p43
      %p50 = scmp.eq.s32.totalorder %s20, 7
      %p51 = por %p49, %p50
      %p52 = scmp.ne.s32.totalorder %s44, %s47
      %p53 = scmp.eq.s32.totalorder %s20, 0
      %p54 = por %p52, %p53
      %p55 = scmp.ne.s32.totalorder %s44, %s47
      %p56 = scmp.eq.s32.totalorder %s25, 7
      %p57 = por %p55, %p56
      %p58 = scmp.ne.s32.totalorder %s47, %s48
      %p59 = scmp.eq.s32.totalorder %s25, 0
      %p60 = por %p58, %p59
      %p61 = scmp.ne.s32.totalorder %s47, %s48
      %p62 = scmp.eq.s32.totalorder %s26, 7
      %p63 = por %p61, %p62
      %p65 = scmp.ne.s32.totalorder %s48, %s64
      %p66 = scmp.eq.s32.totalorder %s26, 0
      %p67 = por %p65, %p66
      %s68 = ssub.s32 %s27, %s39
      %s69 = ssub.s32 %s28, %s35
      %s70 = sor.u32 %s68, %s69
      %p71 = scmp.eq.s32.totalorder %s70, 0
      %s73 = sadd.s32 %s72, 1
      %s74 = scalar_select %p71, %s72, %s73
      %p77 = pneg %p71
      %p78 = scmp.eq.s32.totalorder %s20, 7
      %p79 = por %p77, %p78
      %p80 = scmp.ne.s32.totalorder %s72, %s75
      %p81 = scmp.eq.s32.totalorder %s20, 0
      %p82 = por %p80, %p81
      %p83 = scmp.ne.s32.totalorder %s72, %s75
      %p84 = scmp.eq.s32.totalorder %s25, 7
      %p85 = por %p83, %p84
      %p86 = scmp.ne.s32.totalorder %s75, %s76
      %p87 = scmp.eq.s32.totalorder %s25, 0
      %p88 = por %p86, %p87
      %p89 = scmp.ne.s32.totalorder %s75, %s76
      %p90 = scmp.eq.s32.totalorder %s26, 7
      %p91 = por %p89, %p90
      %p93 = scmp.ne.s32.totalorder %s76, %s92
      %p94 = scmp.eq.s32.totalorder %s26, 0
      %p95 = por %p93, %p94
      %s97 = sadd.s32 %s96, 1
      %p100 = scmp.eq.s32.totalorder %s20, 7
      %p101 = scmp.ne.s32.totalorder %s96, %s98
      %p102 = scmp.eq.s32.totalorder %s20, 0
      %p103 = por %p101, %p102
      %p104 = scmp.ne.s32.totalorder %s96, %s98
      %p105 = scmp.eq.s32.totalorder %s25, 7
      %p106 = por %p104, %p105
      %p107 = scmp.ne.s32.totalorder %s98, %s99
      %p108 = scmp.eq.s32.totalorder %s25, 0
      %p109 = por %p107, %p108
      %p110 = scmp.ne.s32.totalorder %s98, %s99
      %p111 = scmp.eq.s32.totalorder %s26, 7
      %p112 = por %p110, %p111
      %p114 = scmp.ne.s32.totalorder %s99, %s113
      %p115 = scmp.eq.s32.totalorder %s26, 0
      %p116 = por %p114, %p115
      %s118 = sadd.s32 %s117, 1
      %p121 = scmp.eq.s32.totalorder %s20, 7
      %p122 = scmp.ne.s32.totalorder %s117, %s119
      %p123 = scmp.eq.s32.totalorder %s20, 0
      %p124 = por %p122, %p123
      %p125 = scmp.ne.s32.totalorder %s117, %s119
      %p126 = scmp.eq.s32.totalorder %s25, 7
      %p127 = por %p125, %p126
      %p128 = scmp.ne.s32.totalorder %s119, %s120
      %p129 = scmp.eq.s32.totalorder %s25, 0
      %p130 = por %p128, %p129
      %p131 = scmp.ne.s32.totalorder %s119, %s120
      %p132 = scmp.eq.s32.totalorder %s26, 7
      %p133 = por %p131, %p132
      %p135 = scmp.ne.s32.totalorder %s120, %s134
      %p136 = scmp.eq.s32.totalorder %s26, 0
      %p137 = por %p135, %p136
      %s139 = sadd.s32 %s138, 1
      %p142 = scmp.eq.s32.totalorder %s20, 7
      %p143 = scmp.ne.s32.totalorder %s138, %s140
      %p144 = scmp.eq.s32.totalorder %s20, 0
      %p145 = por %p143, %p144
      %p146 = scmp.ne.s32.totalorder %s138, %s140
      %p147 = scmp.eq.s32.totalorder %s25, 7
      %p148 = por %p146, %p147
      %p149 = scmp.ne.s32.totalorder %s140, %s141
      %p150 = scmp.eq.s32.totalorder %s25, 0
      %p151 = por %p149, %p150
      %p152 = scmp.ne.s32.totalorder %s140, %s141
      %p153 = scmp.eq.s32.totalorder %s26, 7
      %p154 = por %p152, %p153
      %p156 = scmp.ne.s32.totalorder %s141, %s155
      %p157 = scmp.eq.s32.totalorder %s26, 0
      %p158 = por %p156, %p157
      %s159 = ssub.s32 %s27, %s39
      %s160 = ssub.s32 %s28, %s35
      %s161 = sor.u32 %s159, %s160
      %p162 = scmp.eq.s32.totalorder %s161, 0
      %s164 = sadd.s32 %s163, 1
      %s165 = scalar_select %p162, %s163, %s164
      %p168 = pneg %p162
      %p169 = scmp.eq.s32.totalorder %s20, 7
      %p170 = por %p168, %p169
      %p171 = scmp.ne.s32.totalorder %s163, %s166
      %p172 = scmp.eq.s32.totalorder %s20, 0
      %p173 = por %p171, %p172
      %p174 = scmp.ne.s32.totalorder %s163, %s166
      %p175 = scmp.eq.s32.totalorder %s25, 7
      %p176 = por %p174, %p175
      %p177 = scmp.ne.s32.totalorder %s166, %s167
      %p178 = scmp.eq.s32.totalorder %s25, 0
      %p179 = por %p177, %p178
      %p180 = scmp.ne.s32.totalorder %s166, %s167
      %p181 = scmp.eq.s32.totalorder %s26, 7
      %p182 = por %p180, %p181
      %p184 = scmp.ne.s32.totalorder %s167, %s183
      %p185 = scmp.eq.s32.totalorder %s26, 0
      %p186 = por %p184, %p185
      %p187 = scmp.le.s32.totalorder 1, %s20
      %p188 = scmp.lt.s32.totalorder %s20, 9
      %p189 = pnand %p187, %p188
      %p190 = pneg %p189
      // Predicated region
      $region9: #{tpu_custom_call.1} parent=5 // pred_check
        _
      $region10: #{tpu_custom_call.1} parent=5 // pred_check_branch
        %192 = sbr.rel (%p189) target = $region12
      $region11: #{tpu_custom_call.1} parent=5 // pred_region
        %s193 = ssub.s32 %s20, 1
        // Predicated region
        $region13: #{tpu_custom_call.1} parent=11 // pred_check
          %p194 = pneg %p109
        $region14: #{tpu_custom_call.1} parent=11 // pred_check_branch
          %196 = sbr.rel (%p194) target = $region16
        $region15: #{tpu_custom_call.1} parent=11 // pred_region
          _
        $region16: #{tpu_custom_call.1} parent=11 // pred_fallthru
          _
        // Predicated region
        $region17: #{tpu_custom_call.1} parent=11 // pred_check
          %p197 = pneg %p130
        $region18: #{tpu_custom_call.1} parent=11 // pred_check_branch
          %199 = sbr.rel (%p197) target = $region20
        $region19: #{tpu_custom_call.1} parent=11 // pred_region
          _
        $region20: #{tpu_custom_call.1} parent=11 // pred_fallthru
          _
        // Predicated region
        $region21: #{tpu_custom_call.1} parent=11 // pred_check
          %p200 = pneg %p151
        $region22: #{tpu_custom_call.1} parent=11 // pred_check_branch
          %202 = sbr.rel (%p200) target = $region24
        $region23: #{tpu_custom_call.1} parent=11 // pred_region
          _
        $region24: #{tpu_custom_call.1} parent=11 // pred_fallthru
          _
      $region12: #{tpu_custom_call.1} parent=5 // pred_fallthru
        _
      %p203 = scmp.lt.s32.totalorder %s20, 8
      // Predicated region
      $region25: #{tpu_custom_call.1} parent=5 // pred_check
        %p204 = pneg %p203
      $region26: #{tpu_custom_call.1} parent=5 // pred_check_branch
        %206 = sbr.rel (%p204) target = $region28
      $region27: #{tpu_custom_call.1} parent=5 // pred_region
        // Predicated region
        $region29: #{tpu_custom_call.1} parent=27 // pred_check
          %p207 = pneg %p54
        $region30: #{tpu_custom_call.1} parent=27 // pred_check_branch
          %209 = sbr.rel (%p207) target = $region32
        $region31: #{tpu_custom_call.1} parent=27 // pred_region
          %s210 = sand.u32 %s44, 1
          %s211 = scalar_lea.sflag [#allocation3], %s210
          %s212 = sand.u32 %s44, 1
          %s213 = smul.addr %s212, 16
          %s214 = scalar_lea.vmem [#allocation2], %s213
          %s215 = smul.u32 2, %s28
          %s217 = ssub.s32 256, 256
          %218 = vsyncadd %s211, %s217
          %s219 = smul.addr %s27, 8
          %s220 = sadd.s32 %s215, %s219
          %s221 = smul.addr %s220, 128
          %s222 = scalar_lea.hbm %s0, %s221
          %s224 = sshll.u32 %s214, 4
          %s225 = int_to_ptr.vmem [resolvable:$true] %s224
          %227 = dma.hbm_to_vmem [thread:$0]  %s222, 256, %s225, %s211
        $region32: #{tpu_custom_call.1} parent=27 // pred_fallthru
          _
        // Predicated region
        $region33: #{tpu_custom_call.1} parent=27 // pred_check
          %p228 = pneg %p82
        $region34: #{tpu_custom_call.1} parent=27 // pred_check_branch
          %230 = sbr.rel (%p228) target = $region36
        $region35: #{tpu_custom_call.1} parent=27 // pred_region
          %s231 = sand.u32 %s72, 1
          %s232 = scalar_lea.sflag [#allocation6], %s231
          %s233 = sand.u32 %s72, 1
          %s234 = smul.addr %s233, 4
          %s235 = scalar_lea.vmem [#allocation5], %s234
          %s236 = smul.u32 2, %s28
          %s238 = ssub.s32 64, 64
          %239 = vsyncadd %s232, %s238
          %s240 = smul.addr %s27, 8
          %s241 = sadd.s32 %s236, %s240
          %s242 = smul.addr %s241, 32
          %s243 = scalar_lea.hbm %s1, %s242
          %s245 = sshll.u32 %s235, 4
          %s246 = int_to_ptr.vmem [resolvable:$true] %s245
          %248 = dma.hbm_to_vmem [thread:$0]  %s243, 64, %s246, %s232
        $region36: #{tpu_custom_call.1} parent=27 // pred_fallthru
          _
      $region28: #{tpu_custom_call.1} parent=5 // pred_fallthru
        _
      %p249 = scmp.le.s32.totalorder 1, %s20
      %p250 = scmp.lt.s32.totalorder %s20, 9
      %p251 = pnand %p249, %p250
      %p252 = pneg %p251
      // Predicated region
      $region37: #{tpu_custom_call.1} parent=5 // pred_check
        _
      $region38: #{tpu_custom_call.1} parent=5 // pred_check_branch
        %254 = sbr.rel (%p251) target = $region40
      $region39: #{tpu_custom_call.1} parent=5 // pred_region
        %s255 = ssub.s32 %s20, 1
        %s256 = sand.u32 %s47, 1
        %s257 = scalar_lea.sflag [#allocation3], %s256
        %s258 = sand.u32 %s47, 1
        %s259 = smul.addr %s258, 16
        %s260 = scalar_lea.vmem [#allocation2], %s259
        // Predicated region
        $region41: #{tpu_custom_call.1} parent=39 // pred_check
          %p261 = pneg %p60
        $region42: #{tpu_custom_call.1} parent=39 // pred_check_branch
          %263 = sbr.rel (%p261) target = $region44
        $region43: #{tpu_custom_call.1} parent=39 // pred_region
          %264 = dma.done %s257, 256
        $region44: #{tpu_custom_call.1} parent=39 // pred_fallthru
          _
        %s265 = sand.u32 %s75, 1
        %s266 = scalar_lea.sflag [#allocation6], %s265
        %s267 = sand.u32 %s75, 1
        %s268 = smul.addr %s267, 4
        %s269 = scalar_lea.vmem [#allocation5], %s268
        // Predicated region
        $region45: #{tpu_custom_call.1} parent=39 // pred_check
          %p270 = pneg %p88
        $region46: #{tpu_custom_call.1} parent=39 // pred_check_branch
          %272 = sbr.rel (%p270) target = $region48
        $region47: #{tpu_custom_call.1} parent=39 // pred_region
          %273 = dma.done %s266, 64
        $region48: #{tpu_custom_call.1} parent=39 // pred_fallthru
          _
        %s274 = sand.u32 %s47, 1
        %s275 = scalar_lea.sflag [#allocation3], %s274
        %s276 = sand.u32 %s47, 1
        %s277 = smul.addr %s276, 16
        %s278 = scalar_lea.vmem [#allocation2], %s277
        %p279 = pneg %p60
        %p280 = pneg %p57
        %s281 = sand.u32 %s75, 1
        %s282 = scalar_lea.sflag [#allocation6], %s281
        %s283 = sand.u32 %s75, 1
        %s284 = smul.addr %s283, 4
        %s285 = scalar_lea.vmem [#allocation5], %s284
        %p286 = pneg %p88
        %p287 = pneg %p85
        %p288 = pneg %p109
        %p289 = pneg %p106
        %p290 = pneg %p130
        %p291 = pneg %p127
        %p292 = pneg %p151
        %p293 = pneg %p148
        %p294 = pneg %p179
        %p295 = pneg %p176
        %s296 = sand.u32 %s166, 1
        %s297 = scalar_lea.sflag [#allocation4], %s296
        %s298 = sand.u32 %s166, 1
        %s299 = smul.addr %s298, 16
        %s300 = scalar_lea.vmem [#allocation7], %s299
        %s301 = smul.u32 2, %s30
        %s302 = smul.u32 2, %s30
        %s303 = smul.u32 2, %s30
        %v304 = vld [vmem:[%s2] sm:$0xff]
        %v305 = vld [vmem:[%s260] sm:$0xff]
        %v306 = vld [vmem:[%s260 + $0x8] sm:$0xff]
        %v307 = vld [vmem:[%s3] sm:$0xff]
        %v308 = vld [vmem:[%s269] sm:$0xf]
        %v311 = vunpack.c.l.s4 1983009808
        %v312 = vunpack.c.0.s8 %v311
        %v313 = vlaneseq
        %v314 = vshrl.u32 %v313, 7
        %v315 = vsub.s32 %v312, %v314
        %v316 = vrot.slane %v308, %v315
        %v317 = vcombine.high %v316, %v316
        %vm318 = vcmask 15360
        %v320 = vsel %vm318, %v307, 0
        %vm322 = vcmask 1041408
        %v323 = vsel %vm322, %v316, 0
        %v325 = vsel %vm322, %v317, 0
        %327 = vmatprep.subr.mxu0 0.0
        %328 = vmatpush1.msra.mxu0 0.0
        %329 = vmatprep.subr.mxu0 0.0
        %330 = vmatpush1.msra.mxu0 0.0
        %331 = vmatprep.subr.mxu0 0.0
        %332 = vmatpush1.msra.mxu0 0.0
        %333 = vmatprep.subr.mxu0 0.0
        %334 = vmatpush1.msra.mxu0 0.0
        %335 = vmatprep.subr.mxu0 0.0
        %336 = vmatpush1.msra.mxu0 0.0
        %337 = vmatprep.subr.mxu0 0.0
        %338 = vmatpush1.msra.mxu0 0.0
        %339 = vmatprep.subr.mxu0 0.0
        %340 = vmatpush1.msra.mxu0 0.0
        %341 = vmatprep.subr.mxu0 0.0
        %342 = vmatpush1.msra.mxu0 0.0
        %343 = vmatprep.subr.mxu0 0.0
        %344 = vmatpush1.msra.mxu0 0.0
        %345 = vmatprep.subr.mxu0 0.0
        %346 = vmatpush1.msra.mxu0 0.0
        %347 = vmatprep.subr.mxu0 0.0
        %348 = vmatpush1.msra.mxu0 0.0
        %349 = vmatprep.subr.mxu0 0.0
        %350 = vmatpush1.msra.mxu0 0.0
        %351 = vmatprep.subr.mxu0 0.0
        %352 = vmatpush1.msra.mxu0 0.0
        %353 = vmatprep.subr.mxu0 0.0
        %354 = vmatpush1.msra.mxu0 0.0
        %355 = vmatprep.subr.mxu0 0.0
        %356 = vmatpush1.msra.mxu0 0.0
        %357 = vmatprep.subr.mxu0 %v325
        %358 = vmatpush1.msra.mxu0 %v323
        %359 = vmatprep.subr.mxu0 0.0
        %360 = vmatpush2.msra.mxu0 0.0
        %361 = vmatprep.subr.mxu0 0.0
        %362 = vmatpush2.msra.mxu0 0.0
        %363 = vmatprep.subr.mxu0 0.0
        %364 = vmatpush2.msra.mxu0 0.0
        %365 = vmatprep.subr.mxu0 0.0
        %366 = vmatpush2.msra.mxu0 0.0
        %367 = vmatprep.subr.mxu0 0.0
        %368 = vmatpush2.msra.mxu0 0.0
        %369 = vmatprep.subr.mxu0 0.0
        %370 = vmatpush2.msra.mxu0 0.0
        %371 = vmatprep.subr.mxu0 0.0
        %372 = vmatpush2.msra.mxu0 0.0
        %373 = vmatprep.subr.mxu0 0.0
        %374 = vmatpush2.msra.mxu0 0.0
        %375 = vmatprep.subr.mxu0 0.0
        %376 = vmatpush2.msra.mxu0 0.0
        %377 = vmatprep.subr.mxu0 0.0
        %378 = vmatpush2.msra.mxu0 0.0
        %379 = vmatprep.subr.mxu0 0.0
        %380 = vmatpush2.msra.mxu0 0.0
        %381 = vmatprep.subr.mxu0 0.0
        %382 = vmatpush2.msra.mxu0 0.0
        %383 = vmatprep.subr.mxu0 0.0
        %384 = vmatpush2.msra.mxu0 0.0
        %385 = vmatprep.subr.mxu0 0.0
        %386 = vmatpush2.msra.mxu0 0.0
        %387 = vmatprep.subr.mxu0 0.0
        %388 = vmatpush2.msra.mxu0 0.0
        %389 = vmatprep.subr.mxu0 0.0
        %390 = vmatpush2.msra.mxu0 0.0
        %391 = vmatprep.mubr.f32.mxu0 0.0
        %392 = vmatmul.mubr.f32.gmra.mxu0 %v320
        %v393 = vpop.f32.mrf.mxu0
        %v394 = vadd.f32 0.0, %v393
        %v395 = vpop.f32.mrf.mxu0
        %v396 = vadd.f32 0.0, %v395
        %397 = vdwg.mxu0
        %vm398 = vcmask 64512
        %v400 = vsel %vm398, %v304, 0
        %402 = vmatprep.subr.mxu0 0.0
        %403 = vmatpush1.msra.mxu0 0.0
        %404 = vmatprep.subr.mxu0 0.0
        %405 = vmatpush1.msra.mxu0 0.0
        %406 = vmatprep.subr.mxu0 0.0
        %407 = vmatpush1.msra.mxu0 0.0
        %408 = vmatprep.subr.mxu0 0.0
        %409 = vmatpush1.msra.mxu0 0.0
        %410 = vmatprep.subr.mxu0 0.0
        %411 = vmatpush1.msra.mxu0 0.0
        %412 = vmatprep.subr.mxu0 0.0
        %413 = vmatpush1.msra.mxu0 0.0
        %414 = vmatprep.subr.mxu0 0.0
        %415 = vmatpush1.msra.mxu0 0.0
        %416 = vmatprep.subr.mxu0 0.0
        %417 = vmatpush1.msra.mxu0 0.0
        %418 = vmatprep.subr.mxu0 0.0
        %419 = vmatpush1.msra.mxu0 0.0
        %420 = vmatprep.subr.mxu0 0.0
        %421 = vmatpush1.msra.mxu0 0.0
        %422 = vmatprep.subr.mxu0 0.0
        %423 = vmatpush1.msra.mxu0 0.0
        %424 = vmatprep.subr.mxu0 0.0
        %425 = vmatpush1.msra.mxu0 0.0
        %426 = vmatprep.subr.mxu0 0.0
        %427 = vmatpush1.msra.mxu0 0.0
        %428 = vmatprep.subr.mxu0 0.0
        %429 = vmatpush1.msra.mxu0 0.0
        %430 = vmatprep.subr.mxu0 0.0
        %431 = vmatpush1.msra.mxu0 0.0
        %432 = vmatprep.subr.mxu0 %v306
        %433 = vmatpush1.msra.mxu0 %v305
        %434 = vmatprep.subr.mxu0 0.0
        %435 = vmatpush2.msra.mxu0 0.0
        %436 = vmatprep.subr.mxu0 0.0
        %437 = vmatpush2.msra.mxu0 0.0
        %438 = vmatprep.subr.mxu0 0.0
        %439 = vmatpush2.msra.mxu0 0.0
        %440 = vmatprep.subr.mxu0 0.0
        %441 = vmatpush2.msra.mxu0 0.0
        %442 = vmatprep.subr.mxu0 0.0
        %443 = vmatpush2.msra.mxu0 0.0
        %444 = vmatprep.subr.mxu0 0.0
        %445 = vmatpush2.msra.mxu0 0.0
        %446 = vmatprep.subr.mxu0 0.0
        %447 = vmatpush2.msra.mxu0 0.0
        %448 = vmatprep.subr.mxu0 0.0
        %449 = vmatpush2.msra.mxu0 0.0
        %450 = vmatprep.subr.mxu0 0.0
        %451 = vmatpush2.msra.mxu0 0.0
        %452 = vmatprep.subr.mxu0 0.0
        %453 = vmatpush2.msra.mxu0 0.0
        %454 = vmatprep.subr.mxu0 0.0
        %455 = vmatpush2.msra.mxu0 0.0
        %456 = vmatprep.subr.mxu0 0.0
        %457 = vmatpush2.msra.mxu0 0.0
        %458 = vmatprep.subr.mxu0 0.0
        %459 = vmatpush2.msra.mxu0 0.0
        %460 = vmatprep.subr.mxu0 0.0
        %461 = vmatpush2.msra.mxu0 0.0
        %462 = vmatprep.subr.mxu0 0.0
        %463 = vmatpush2.msra.mxu0 0.0
        %464 = vmatprep.subr.mxu0 0.0
        %465 = vmatpush2.msra.mxu0 0.0
        %466 = vmatprep.mubr.f32.mxu0 0.0
        %467 = vmatmul.mubr.f32.gmra.mxu0 %v400
        %v468 = vpop.f32.mrf.mxu0
        %v469 = vadd.f32 %v394, %v468
        %v470 = vpop.f32.mrf.mxu0
        %v471 = vadd.f32 %v396, %v470
        %472 = vdwg.mxu0
        %v473 = vld [vmem:[%s4] sm:$0xff]
        %475 = vset.pattern.permute.xlu0 0
        %476 = vperm.xlu0 %475, %v473
        %v477 = vpop.permute.xlu0 %476
        %v479 = vadd.f32 %v469, %v477
        %v480 = vadd.f32 %v471, %v477
        %v481 = vmax.f32 %v479, 0.0
        %v482 = vmax.f32 %v480, 0.0
        %483 = vst [vmem:[%s300] sm:$0xff] %v481
        %484 = vst [vmem:[%s300 + $0x8] sm:$0xff] %v482
        %s485 = sand.u32 %s166, 1
        %s486 = scalar_lea.sflag [#allocation4], %s485
        %s487 = sand.u32 %s166, 1
        %s488 = smul.addr %s487, 16
        %s489 = scalar_lea.vmem [#allocation7], %s488
        // Predicated region
        $region49: #{tpu_custom_call.1} parent=39 // pred_check
          %p490 = pneg %p176
        $region50: #{tpu_custom_call.1} parent=39 // pred_check_branch
          %492 = sbr.rel (%p490) target = $region52
        $region51: #{tpu_custom_call.1} parent=39 // pred_region
          %s493 = smul.u32 2, %s30
          %s495 = ssub.s32 256, 256
          %496 = vsyncadd %s486, %s495
          %s497 = smul.addr %s29, 8
          %s498 = sadd.s32 %s493, %s497
          %s499 = smul.addr %s498, 128
          %s500 = scalar_lea.hbm %s5, %s499
          %s502 = sshll.u32 %s489, 4
          %s503 = int_to_ptr.vmem [resolvable:$true] %s502
          %505 = dma.vmem_to_hbm [thread:$0]  %s503, 256, %s500, %s486
        $region52: #{tpu_custom_call.1} parent=39 // pred_fallthru
          _
      $region40: #{tpu_custom_call.1} parent=5 // pred_fallthru
        _
      %p506 = scmp.le.s32.totalorder 2, %s20
      // Predicated region
      $region53: #{tpu_custom_call.1} parent=5 // pred_check
        %p507 = pneg %p506
      $region54: #{tpu_custom_call.1} parent=5 // pred_check_branch
        %509 = sbr.rel (%p507) target = $region56
      $region55: #{tpu_custom_call.1} parent=5 // pred_region
        %s510 = ssub.s32 %s20, 2
        // Predicated region
        $region57: #{tpu_custom_call.1} parent=55 // pred_check
          %p511 = pneg %p182
        $region58: #{tpu_custom_call.1} parent=55 // pred_check_branch
          %513 = sbr.rel (%p511) target = $region60
        $region59: #{tpu_custom_call.1} parent=55 // pred_region
          %s514 = sand.u32 %s167, 1
          %s515 = scalar_lea.sflag [#allocation4], %s514
          %s516 = sand.u32 %s167, 1
          %s517 = smul.addr %s516, 16
          %s518 = scalar_lea.vmem [#allocation7], %s517
          %519 = dma.done %s515, 256
        $region60: #{tpu_custom_call.1} parent=55 // pred_fallthru
          _
      $region56: #{tpu_custom_call.1} parent=5 // pred_fallthru
        _
    $region6: #{tpu_custom_call.1} parent=1 // loop_footer
      %s24 = sadd.s32 1, %s20
    $region7: #{tpu_custom_call.1} parent=1 // loop_footer_branch
      %19 = sbr.rel target = $region3
    $region8: #{tpu_custom_call.1} parent=1 // loop_exit
      _
    %520 = vsyncpa [#allocation3], 1
    %s521 = scalar_lea.sflag [#allocation3], 1
    %522 = vsyncpa %s521, 1
    %523 = vsyncpa [#allocation6], 1
    %s524 = scalar_lea.sflag [#allocation6], 1
    %525 = vsyncpa %s524, 1
    %526 = vsyncpa [#allocation4], 1
    %s527 = scalar_lea.sflag [#allocation4], 1
    %528 = vsyncpa %s527, 1

</llo_original>
